<compile_context>
chip_gen: v7x
topology: tpu7x:2x2x1
jax: 0.10.0
libtpu: 0.0.40
codegen_flags: <defaults>
</compile_context>

<pallas_src>
import jax
import jax.numpy as jnp
from jax.experimental import pallas as pl
from jax.experimental.pallas import tpu as pltpu

_LANES = 128
_MIN_SPLIT_BLOCK_BYTES = 2 * 1024 * 1024  # only split grid if each block >= 2 MiB


def _unary_op(x):
    # The concrete unary operator under test (ReLU), dtype-preserving.
    return jnp.maximum(x, jnp.zeros((), x.dtype))


def _unary_kernel(x_ref, o_ref):
    o_ref[...] = _unary_op(x_ref[...])


def _round_up(a, b):
    return ((a + b - 1) // b) * b


def _vmem_budget():
    """Per-chip (block_cap_bytes, vmem_limit_bytes)."""
    try:
        vmem_cap = pltpu.get_tpu_info().vmem_capacity_bytes
    except Exception:
        vmem_cap = 64 * 1024 * 1024  # conservative: assume v7x-class VMEM
    if vmem_cap >= 100 * 1024 * 1024:
        # v5e / v6e: 128 MiB physical VMEM -> 8 MiB blocks, 64 MiB scoped limit
        return 8 * 1024 * 1024, 64 * 1024 * 1024
    # v7x-class: 64 MiB per-TC VMEM -> 6 MiB blocks, 44 MiB limit (headroom)
    return 6 * 1024 * 1024, 44 * 1024 * 1024


def _pick_block_rows(rows, width, itemsize, sublane, block_cap_bytes):
    total_bytes = rows * width * itemsize
    cap_rows = max(block_cap_bytes // (width * itemsize), sublane)
    cap_rows -= cap_rows % sublane
    if total_bytes >= 2 * _MIN_SPLIT_BLOCK_BYTES and rows >= 2 * sublane:
        # Large input: >= 2 grid steps so v7x can shard the parallel axis
        # across both TensorCores; each block stays multi-MiB so DMA dominates
        # the ~0.35 us per-step fixed cost.
        target = _round_up(pl.cdiv(rows, 2), sublane)
        return min(cap_rows, target)
    # Small input: one full-array block (valid regardless of (8,128) rounding).
    return rows if rows <= cap_rows else cap_rows


def _launch_2d(x2d, block_rows, vmem_limit, alias=False):
    rows, width = x2d.shape
    dtype = x2d.dtype
    itemsize = jnp.dtype(dtype).itemsize
    extra = {"input_output_aliases": {0: 0}} if alias else {}
    return pl.pallas_call(
        _unary_kernel,
        out_shape=jax.ShapeDtypeStruct((rows, width), dtype),
        grid_spec=pltpu.PrefetchScalarGridSpec(
            num_scalar_prefetch=0,
            grid=(pl.cdiv(rows, block_rows),),
            in_specs=[pl.BlockSpec((block_rows, width), lambda i: (i, 0))],
            out_specs=pl.BlockSpec((block_rows, width), lambda i: (i, 0)),
        ),
        compiler_params=pltpu.CompilerParams(
            dimension_semantics=("parallel",),
            vmem_limit_bytes=vmem_limit,
        ),
        cost_estimate=pl.CostEstimate(
            flops=rows * width,
            transcendentals=0,
            bytes_accessed=2 * rows * width * itemsize,
        ),
        **extra,
    )(x2d)


def unary_elementwise(x, donate_input=False):
    """Apply the unary op element-wise to x (any shape) via a Pallas TPU kernel."""
    orig_shape = x.shape
    dtype = x.dtype
    itemsize = jnp.dtype(dtype).itemsize
    n = x.size
    if n == 0:
        return x

    # dtype-aware sublane granularity: sub-32-bit dtypes pack along sublanes.
    sublane = max(8, 32 // itemsize)
    block_cap_bytes, vmem_limit = _vmem_budget()

    x_flat = jnp.ravel(x)

    if n % _LANES == 0:
        # Aligned path: pure metadata reshape, zero extra HBM traffic.
        width = _LANES
        for cand in (1024, 512, 256):  # wider lane-dense slab when possible
            if n % cand == 0 and (n // cand) >= sublane:
                width = cand
                break
        rows = n // width
        block_rows = _pick_block_rows(rows, width, itemsize, sublane,
                                      block_cap_bytes)
        out2d = _launch_2d(x_flat.reshape(rows, width), block_rows, vmem_limit,
                           alias=donate_input)
        return out2d.reshape(orig_shape)

    # Ragged size: stream the 128-aligned body through Pallas, compute the
    # small (<128-element) remainder with plain jnp. No full-array pad/slice.
    # TODO(synk): fold the tail into the kernel via a scalar-prefetch length
    # plus masked pltpu.store to also drop the final concatenate copy.
    body_rows = n // _LANES
    if body_rows == 0:
        # Tiny input (< 128 elements): single full-array block (1, n).
        out_flat = _launch_2d(x_flat.reshape(1, n), 1, vmem_limit).reshape(n)
        return out_flat.reshape(orig_shape)

    n_body = body_rows * _LANES
    block_rows = _pick_block_rows(body_rows, _LANES, itemsize, sublane,
                                  block_cap_bytes)
    body_out = _launch_2d(x_flat[:n_body].reshape(body_rows, _LANES),
                          block_rows, vmem_limit).reshape(n_body)
    tail_out = _unary_op(x_flat[n_body:])
    return jnp.concatenate([body_out, tail_out]).reshape(orig_shape)


if __name__ == "__main__":
    key = jax.random.PRNGKey(0)
    k1, k2, k3 = jax.random.split(key, 3)

    # Primary: small NCHW input consistent with the eltwise-unary operator tests.
    x = jax.random.normal(k1, (2, 4, 16, 16), dtype=jnp.float32)
    y = jax.block_until_ready(unary_elementwise(x))
    assert y.shape == x.shape and y.dtype == x.dtype
    assert jnp.array_equal(y, jnp.maximum(x, 0.0))

    # Ragged (non-128-multiple) size exercises the no-pad body+tail path.
    x2 = jax.random.normal(k2, (7, 13, 5), dtype=jnp.float32)
    y2 = jax.block_until_ready(unary_elementwise(x2))
    assert jnp.array_equal(y2, jnp.maximum(x2, 0.0))

    # Packed dtype (bf16) exercises the dtype-aware sublane rounding.
    x3 = jax.random.normal(k3, (2, 4, 16, 16), dtype=jnp.bfloat16)
    y3 = jax.block_until_ready(unary_elementwise(x3))
    assert y3.dtype == x3.dtype
    assert jnp.array_equal(y3, jnp.maximum(x3, jnp.zeros((), jnp.bfloat16)))

    print("KERNEL_OK")
</pallas_src>

<mosaic_0001>
module attributes {stable_mosaic.version = 11 : i64} {
  func.func @_unary_kernel(%arg0: i32, %arg1: memref<8x256xf32, #tpu.memory_space<vmem>>, %arg2: memref<8x256xf32, #tpu.memory_space<vmem>>) attributes {dimension_semantics = [#tpu.dimension_semantics<parallel>], iteration_bounds = array<i64: 1>, scalar_prefetch = 0 : i64, scratch_operands = 0 : i64, tpu.core_type = #tpu.core_type<tc>, window_params = [{transform_indices = @transform_0, window_bounds = array<i64: 8, 256>}, {transform_indices = @transform_1, window_bounds = array<i64: 8, 256>}]} {
    %c0 = arith.constant 0 : index
    %c0_0 = arith.constant 0 : index
    %0 = vector.load %arg1[%c0, %c0_0] : memref<8x256xf32, #tpu.memory_space<vmem>>, vector<8x256xf32>
    %cst = arith.constant 0.000000e+00 : f32
    %1 = vector.broadcast %cst : f32 to vector<8x256xf32>
    %2 = arith.maximumf %0, %1 : vector<8x256xf32>
    %c0_1 = arith.constant 0 : index
    %c0_2 = arith.constant 0 : index
    %3 = vector.load %arg2[%c0_1, %c0_2] : memref<8x256xf32, #tpu.memory_space<vmem>>, vector<8x256xf32>
    tpu.vector_store %arg2[%c0_1, %c0_2], %2 {strides = array<i32>} : memref<8x256xf32, #tpu.memory_space<vmem>>, vector<8x256xf32>,
    return
  }
  func.func @transform_0(%arg0: i32) -> (i32, i32) {
    %c0_i32 = arith.constant 0 : i32
    %c0_i32_0 = arith.constant 0 : i32
    return %arg0, %c0_i32 : i32, i32
  }
  func.func @transform_1(%arg0: i32) -> (i32, i32) {
    %c0_i32 = arith.constant 0 : i32
    %c0_i32_0 = arith.constant 0 : i32
    return %arg0, %c0_i32 : i32, i32
  }
}

</mosaic_0001>

<llo_original>
// kernel: tpu_custom_call.1
$region0: #{tpu_custom_call.1}
  #allocation0 [shape = 'u32[]', space=smem, size = 0x4, offset = 0x4, fixed_abs, tag = 'smem constant byte address 0x4 - core index']
  #allocation1 [shape = 'u32[144,128]{1,0:T(1,128)}', space=vmem, size = 0x12000, scoped, tag = 'internal scratch']
  %s0 = inlined_call_operand.hbm [shape: f32[8,256], index: 0, kind: input, shape index: {}]
  %s1 = inlined_call_operand.hbm [shape: f32[8,256], index: 1, kind: output, shape index: {}]
  %s2 = sld [smem:[#allocation0]]
  $region18: #{tpu_custom_call.1} parent=0
    _
  %s4 = ssub.s32 1, %s2
  %s5 = scalar_select 0, %s4, %s2
  $region1: #{tpu_custom_call.1} parent=0
    #allocation2 [shape = 'u8[8192]{0}', space=vmem, size = 0x2000, scoped, tag = 'input window, operand 0, single buffered']
    #allocation3 [shape = 's32[1]{0}', space=sflag, size = 0x4, scoped, tag = 'scoped memory for tpu_custom_call.1']
    #allocation4 [shape = 's32[1]{0}', space=sflag, size = 0x4, scoped, tag = 'scoped memory for tpu_custom_call.1']
    #allocation5 [shape = 'u8[8192]{0}', space=vmem, size = 0x2000, scoped, tag = 'output window, operand 0, single buffered']
    %6 = vsyncpa [#allocation3], 0
    %7 = vsyncpa [#allocation4], 0
    // Predicated region
    $region2: #{tpu_custom_call.1} parent=1 // pred_check
      _
    $region3: #{tpu_custom_call.1} parent=1 // pred_check_branch
      %9 = sbr.rel (0) target = $region5
    $region4: #{tpu_custom_call.1} parent=1 // pred_region
      %s11 = ssub.s32 256, 256
      %12 = vsyncadd [#allocation3], %s11
      %s14 = sshll.u32 [#allocation2], 4
      %s15 = int_to_ptr.vmem [resolvable:$true] %s14
      %17 = dma.hbm_to_vmem [thread:$0]  %s0, 256, %s15, [#allocation3]
    $region5: #{tpu_custom_call.1} parent=1 // pred_fallthru
      _
    // Predicated region
    $region6: #{tpu_custom_call.1} parent=1 // pred_check
      _
    $region7: #{tpu_custom_call.1} parent=1 // pred_check_branch
      %19 = sbr.rel (0) target = $region9
    $region8: #{tpu_custom_call.1} parent=1 // pred_region
      %20 = dma.done [#allocation3], 256
    $region9: #{tpu_custom_call.1} parent=1 // pred_fallthru
      _
    %v21 = vld [vmem:[#allocation2] sm:$0xff]
    %v22 = vld [vmem:[#allocation2 + $0x8] sm:$0xff]
    %v23 = vmax.f32 %v21, 0.0
    %v24 = vmax.f32 %v22, 0.0
    %25 = vst [vmem:[#allocation5] sm:$0xff] %v23
    %26 = vst [vmem:[#allocation5 + $0x8] sm:$0xff] %v24
    // Predicated region
    $region10: #{tpu_custom_call.1} parent=1 // pred_check
      _
    $region11: #{tpu_custom_call.1} parent=1 // pred_check_branch
      %28 = sbr.rel (0) target = $region13
    $region12: #{tpu_custom_call.1} parent=1 // pred_region
      %s30 = ssub.s32 256, 256
      %31 = vsyncadd [#allocation4], %s30
      %s33 = sshll.u32 [#allocation5], 4
      %s34 = int_to_ptr.vmem [resolvable:$true] %s33
      %36 = dma.vmem_to_hbm [thread:$0]  %s34, 256, %s1, [#allocation4]
    $region13: #{tpu_custom_call.1} parent=1 // pred_fallthru
      _
    // Predicated region
    $region14: #{tpu_custom_call.1} parent=1 // pred_check
      _
    $region15: #{tpu_custom_call.1} parent=1 // pred_check_branch
      %38 = sbr.rel (0) target = $region17
    $region16: #{tpu_custom_call.1} parent=1 // pred_region
      %39 = dma.done [#allocation4], 256
    $region17: #{tpu_custom_call.1} parent=1 // pred_fallthru
      _
    %40 = vsyncpa [#allocation3], 1
    %41 = vsyncpa [#allocation4], 1

</llo_original>
